<compile_context>
chip_gen: v6e
topology: v6e:2x2x1
jax: 0.10.0
libtpu: 0.0.40
codegen_flags: <defaults>
</compile_context>

<pallas_src>
import jax
import jax.numpy as jnp
from jax import lax
from jax.experimental import pallas as pl
from jax.experimental.pallas import tpu as pltpu


def critic_kernel(s1_ref, port_ref, ws1_ref, wport_ref, b1_ref,
                  w34_ref, b34_ref, wv2_ref, bv2_ref, out_ref):
    # s1_ref:    (TB, K*5)    flattened per-asset state-1 features
    # port_ref:  (TB, K+1)    flattened portfolio (col 0 = p0, col k+1 = p_k)
    # ws1_ref:   (K*5, K*64)  block-diag of Score.layer1 rows 0..4
    # wport_ref: (K+1, K*64)  layer1 rows 5 (p0, replicated) and 6 (p_k, block-diag)
    # b1_ref:    (1, K*64)
    # w34_ref:   (K*64, 32)   folded Score.layer3 @ value-head Linear(K,32)
    # b34_ref:   (1, 32)
    # wv2_ref:   (1, 32)      value head Linear(32, 1) weight (row form)
    # bv2_ref:   (1, 1)
    # out_ref:   (1, TB)      lane-dense output row for this batch tile
    h = jnp.maximum(
        jnp.dot(s1_ref[...], ws1_ref[...], preferred_element_type=jnp.float32)
        + jnp.dot(port_ref[...], wport_ref[...], preferred_element_type=jnp.float32)
        + b1_ref[...],
        0.0)                                                          # (TB, K*64)
    hv = jnp.maximum(
        jnp.dot(h, w34_ref[...], preferred_element_type=jnp.float32)
        + b34_ref[...],
        0.0)                                                          # (TB, 32)
    # (1, 32) x (TB, 32) contracting the 32-dims -> (1, TB): lane-dense store.
    v = lax.dot_general(wv2_ref[...], hv,
                        dimension_numbers=(((1,), (1,)), ((), ())),
                        preferred_element_type=jnp.float32) + bv2_ref[...]
    out_ref[...] = v.astype(out_ref.dtype)


def critic_forward(s1_tensor, portfolio, fparams, *, batch_tile=2048):
    B, K, S1 = s1_tensor.shape

    # Pure reshapes (no HBM copy, no concat materialization).
    s1_flat = s1_tensor.reshape(B, K * S1)          # (B, K*5)
    port_flat = portfolio.reshape(B, K + 1)         # (B, K+1)

    # Batch tiling: single whole-array block for small B; multiple-of-8 row
    # tiles for large B (>= 2 parallel grid steps keeps both v7x TCs busy).
    TB = B if B <= batch_tile else batch_tile
    nblk = pl.cdiv(B, TB)
    grid = (nblk,)

    def replicated(a):
        return pl.BlockSpec(a.shape, lambda i: (0,) * a.ndim)

    args = (s1_flat, port_flat,
            fparams["w_s1"], fparams["w_port"], fparams["b1_big"],
            fparams["w34"], fparams["b34"],
            fparams["wv2_row"], fparams["bv2"])

    in_specs = [pl.BlockSpec((TB, K * S1), lambda i: (i, 0)),
                pl.BlockSpec((TB, K + 1), lambda i: (i, 0))]
    in_specs += [replicated(a) for a in args[2:]]

    out = pl.pallas_call(
        critic_kernel,
        out_shape=jax.ShapeDtypeStruct((nblk, TB), jnp.float32),
        grid=grid,
        in_specs=in_specs,
        out_specs=pl.BlockSpec((1, TB), lambda i: (i, 0)),
        compiler_params=pltpu.CompilerParams(
            dimension_semantics=("parallel",)),
    )(*args)

    # (nblk, TB) row-major flatten puts batch rows back in order; padded tail
    # rows of the last tile (if B % TB != 0) are sliced off.
    return out.reshape(nblk * TB, 1)[:B]


def init_params(key, state1_dim=5, state2_dim=2, K=4):
    """Deterministic parameter init (shapes match the PyTorch module).

    Score.layer1 / layer3: kaiming_normal weights (std = sqrt(2/fan_in)),
    uniform(+-1/sqrt(fan_in)) biases.  The Critic's per-forward nn.Linear(K,32)
    and nn.Linear(32,1) use PyTorch-default uniform init, fixed here once.
    Score.layer2 is never used in forward and is omitted.
    """
    ks = jax.random.split(key, 8)
    f32 = jnp.float32
    in1 = state1_dim + state2_dim

    w1 = jax.random.normal(ks[0], (64, in1), f32) * jnp.sqrt(2.0 / in1)
    b1 = jax.random.uniform(ks[1], (64,), f32, -1.0, 1.0) / jnp.sqrt(in1)
    w3 = jax.random.normal(ks[2], (1, 64), f32) * jnp.sqrt(2.0 / 64)
    b3 = jax.random.uniform(ks[3], (1,), f32, -1.0, 1.0) / jnp.sqrt(64)

    wv1 = jax.random.uniform(ks[4], (32, K), f32, -1.0, 1.0) / jnp.sqrt(K)
    bv1 = jax.random.uniform(ks[5], (32,), f32, -1.0, 1.0) / jnp.sqrt(K)
    wv2 = jax.random.uniform(ks[6], (1, 32), f32, -1.0, 1.0) / jnp.sqrt(32)
    bv2 = jax.random.uniform(ks[7], (1,), f32, -1.0, 1.0) / jnp.sqrt(32)

    return dict(
        w1t=w1.T, b1=b1[None, :],
        w3t=w3.T, b3=b3[None, :],
        wv1t=wv1.T, bv1=bv1[None, :],
        wv2t=wv2.T, bv2=bv2[None, :],
    )


def fold_params(params, K):
    """One-time host-side fold of the shared Score weights.

    * layer1 is block-diagonalized and split by input group so the kernel can
      consume the un-concatenated inputs directly:
        W_s1   (K*5, K*64): kron(I_K, w1t[:5])
        W_port (K+1, K*64): row 0 = w1t[5] replicated to every block (p0),
                            rows 1..K = kron(I_K, w1t[6]) (per-asset p_k)
    * layer3 and the value-head Linear(K,32) have no nonlinearity between
      them, so they collapse into W34 / b34 (exact up to fp reassociation).
    NOTE: block-diagonal size grows as K^2; for K beyond ~16-32 use the
    shared-weight (B*K, 7) formulation instead.
    """
    f32 = jnp.float32
    eye = jnp.eye(K, dtype=f32)
    w1t = params["w1t"]                              # (S1+2, 64)
    s1_dim = w1t.shape[0] - 2

    w_s1 = jnp.kron(eye, w1t[:s1_dim, :])            # (K*5, K*64)
    w_p0 = jnp.tile(w1t[s1_dim:s1_dim + 1, :], (1, K))       # (1, K*64)
    w_pk = jnp.kron(eye, w1t[s1_dim + 1:s1_dim + 2, :])      # (K, K*64)
    w_port = jnp.concatenate([w_p0, w_pk], axis=0)   # (K+1, K*64)
    b1_big = jnp.tile(params["b1"], (1, K))          # (1, K*64)

    w3_big = jnp.kron(eye, params["w3t"])            # (K*64, K)
    b3_big = jnp.tile(params["b3"], (1, K))          # (1, K)
    w34 = w3_big @ params["wv1t"]                    # (K*64, 32)
    b34 = b3_big @ params["wv1t"] + params["bv1"]    # (1, 32)

    return dict(
        w_s1=w_s1, w_port=w_port, b1_big=b1_big,
        w34=w34, b34=b34,
        wv2_row=params["wv2t"].T,                    # (1, 32)
        bv2=params["bv2"],                           # (1, 1)
    )


def critic_ref(s1_tensor, portfolio, params):
    """Pure-JAX reference mirroring the PyTorch forward literally."""
    B, K, _ = s1_tensor.shape
    scores = []
    for k in range(K):
        state2 = jnp.concatenate([portfolio[:, 0], portfolio[:, k + 1]], axis=-1)  # (B, 2)
        xk = jnp.concatenate([s1_tensor[:, k, :], state2], axis=-1)                # (B, 7)
        h = jnp.maximum(xk @ params["w1t"] + params["b1"], 0.0)
        scores.append(h @ params["w3t"] + params["b3"])
    scores = jnp.concatenate(scores, axis=-1)                                      # (B, K)
    hv = jnp.maximum(scores @ params["wv1t"] + params["bv1"], 0.0)
    return hv @ params["wv2t"] + params["bv2"]


if __name__ == "__main__":
    key = jax.random.PRNGKey(0)
    k_s1, k_p, k_par = jax.random.split(key, 3)

    B, K, S1 = 2, 4, 5                      # batch, num assets, state1_dim
    s1_tensor = jax.random.normal(k_s1, (B, K, S1), jnp.float32)
    portfolio = jax.random.normal(k_p, (B, K + 1, 1), jnp.float32)
    params = init_params(k_par, state1_dim=S1, state2_dim=2, K=K)
    fparams = fold_params(params, K)

    out = critic_forward(s1_tensor, portfolio, fparams)
    out = jax.block_until_ready(out)

    ref = critic_ref(s1_tensor, portfolio, params)
    assert out.shape == (B, 1), out.shape
    assert jnp.allclose(out, ref, atol=2e-5, rtol=2e-5), (out, ref)
    print("KERNEL_OK")
</pallas_src>

<mosaic_0001>
module attributes {stable_mosaic.version = 11 : i64} {
  func.func @critic_kernel(%arg0: i32, %arg1: memref<2x20xf32, #tpu.memory_space<vmem>>, %arg2: memref<2x5xf32, #tpu.memory_space<vmem>>, %arg3: memref<20x256xf32, #tpu.memory_space<vmem>>, %arg4: memref<5x256xf32, #tpu.memory_space<vmem>>, %arg5: memref<1x256xf32, #tpu.memory_space<vmem>>, %arg6: memref<256x32xf32, #tpu.memory_space<vmem>>, %arg7: memref<1x32xf32, #tpu.memory_space<vmem>>, %arg8: memref<1x32xf32, #tpu.memory_space<vmem>>, %arg9: memref<1x1xf32, #tpu.memory_space<vmem>>, %arg10: memref<1x2xf32, #tpu.memory_space<vmem>>) attributes {dimension_semantics = [#tpu.dimension_semantics<parallel>], iteration_bounds = array<i64: 1>, scalar_prefetch = 0 : i64, scratch_operands = 0 : i64, tpu.core_type = #tpu.core_type<tc>, window_params = [{transform_indices = @transform_0, window_bounds = array<i64: 2, 20>}, {transform_indices = @transform_1, window_bounds = array<i64: 2, 5>}, {pipeline_mode = #tpu.pipeline_mode<synchronous>, transform_indices = @transform_2, window_bounds = array<i64: 20, 256>}, {pipeline_mode = #tpu.pipeline_mode<synchronous>, transform_indices = @transform_3, window_bounds = array<i64: 5, 256>}, {pipeline_mode = #tpu.pipeline_mode<synchronous>, transform_indices = @transform_4, window_bounds = array<i64: 1, 256>}, {pipeline_mode = #tpu.pipeline_mode<synchronous>, transform_indices = @transform_5, window_bounds = array<i64: 256, 32>}, {pipeline_mode = #tpu.pipeline_mode<synchronous>, transform_indices = @transform_6, window_bounds = array<i64: 1, 32>}, {pipeline_mode = #tpu.pipeline_mode<synchronous>, transform_indices = @transform_7, window_bounds = array<i64: 1, 32>}, {pipeline_mode = #tpu.pipeline_mode<synchronous>, transform_indices = @transform_8, window_bounds = array<i64: 1, 1>}, {transform_indices = @transform_9, window_bounds = array<i64: 1, 2>}]} {
    %c0 = arith.constant 0 : index
    %c0_0 = arith.constant 0 : index
    %0 = vector.load %arg1[%c0, %c0_0] : memref<2x20xf32, #tpu.memory_space<vmem>>, vector<2x20xf32>
    %c0_1 = arith.constant 0 : index
    %c0_2 = arith.constant 0 : index
    %1 = vector.load %arg3[%c0_1, %c0_2] : memref<20x256xf32, #tpu.memory_space<vmem>>, vector<20x256xf32>
    %cst = arith.constant dense<0.000000e+00> : vector<2x256xf32>
    %2 = tpu.matmul %0, %1, %cst {dimension_numbers = #tpu.dot_dimension_numbers<[1], [0], [0], [1], [0, 0, 1, 1], [], []>} : vector<2x20xf32>, vector<20x256xf32>, vector<2x256xf32> -> vector<2x256xf32>
    %c0_3 = arith.constant 0 : index
    %c0_4 = arith.constant 0 : index
    %3 = vector.load %arg2[%c0_3, %c0_4] : memref<2x5xf32, #tpu.memory_space<vmem>>, vector<2x5xf32>
    %c0_5 = arith.constant 0 : index
    %c0_6 = arith.constant 0 : index
    %4 = vector.load %arg4[%c0_5, %c0_6] : memref<5x256xf32, #tpu.memory_space<vmem>>, vector<5x256xf32>
    %cst_7 = arith.constant dense<0.000000e+00> : vector<2x256xf32>
    %5 = tpu.matmul %3, %4, %cst_7 {dimension_numbers = #tpu.dot_dimension_numbers<[1], [0], [0], [1], [0, 0, 1, 1], [], []>} : vector<2x5xf32>, vector<5x256xf32>, vector<2x256xf32> -> vector<2x256xf32>
    %6 = arith.addf %2, %5 : vector<2x256xf32>
    %c0_8 = arith.constant 0 : index
    %c0_9 = arith.constant 0 : index
    %7 = vector.load %arg5[%c0_8, %c0_9] : memref<1x256xf32, #tpu.memory_space<vmem>>, vector<1x256xf32>
    %8 = vector.broadcast %7 : vector<1x256xf32> to vector<2x256xf32>
    %9 = arith.addf %6, %8 : vector<2x256xf32>
    %cst_10 = arith.constant 0.000000e+00 : f32
    %10 = vector.broadcast %cst_10 : f32 to vector<2x256xf32>
    %11 = arith.maximumf %9, %10 : vector<2x256xf32>
    %c0_11 = arith.constant 0 : index
    %c0_12 = arith.constant 0 : index
    %12 = vector.load %arg6[%c0_11, %c0_12] : memref<256x32xf32, #tpu.memory_space<vmem>>, vector<256x32xf32>
    %cst_13 = arith.constant dense<0.000000e+00> : vector<2x32xf32>
    %13 = tpu.matmul %11, %12, %cst_13 {dimension_numbers = #tpu.dot_dimension_numbers<[1], [0], [0], [1], [0, 0, 1, 1], [], []>} : vector<2x256xf32>, vector<256x32xf32>, vector<2x32xf32> -> vector<2x32xf32>
    %c0_14 = arith.constant 0 : index
    %c0_15 = arith.constant 0 : index
    %14 = vector.load %arg7[%c0_14, %c0_15] : memref<1x32xf32, #tpu.memory_space<vmem>>, vector<1x32xf32>
    %15 = vector.broadcast %14 : vector<1x32xf32> to vector<2x32xf32>
    %16 = arith.addf %13, %15 : vector<2x32xf32>
    %cst_16 = arith.constant 0.000000e+00 : f32
    %17 = vector.broadcast %cst_16 : f32 to vector<2x32xf32>
    %18 = arith.maximumf %16, %17 : vector<2x32xf32>
    %c0_17 = arith.constant 0 : index
    %c0_18 = arith.constant 0 : index
    %19 = vector.load %arg8[%c0_17, %c0_18] : memref<1x32xf32, #tpu.memory_space<vmem>>, vector<1x32xf32>
    %cst_19 = arith.constant dense<0.000000e+00> : vector<1x2xf32>
    %20 = tpu.matmul %19, %18, %cst_19 {dimension_numbers = #tpu.dot_dimension_numbers<[1], [1], [0], [0], [0, 0, 1, 0], [], []>} : vector<1x32xf32>, vector<2x32xf32>, vector<1x2xf32> -> vector<1x2xf32>
    %c0_20 = arith.constant 0 : index
    %c0_21 = arith.constant 0 : index
    %21 = vector.load %arg9[%c0_20, %c0_21] : memref<1x1xf32, #tpu.memory_space<vmem>>, vector<1x1xf32>
    %22 = vector.broadcast %21 : vector<1x1xf32> to vector<1x2xf32>
    %23 = arith.addf %20, %22 : vector<1x2xf32>
    %c0_22 = arith.constant 0 : index
    %c0_23 = arith.constant 0 : index
    %24 = vector.load %arg10[%c0_22, %c0_23] : memref<1x2xf32, #tpu.memory_space<vmem>>, vector<1x2xf32>
    tpu.vector_store %arg10[%c0_22, %c0_23], %23 {strides = array<i32>} : memref<1x2xf32, #tpu.memory_space<vmem>>, vector<1x2xf32>,
    return
  }
  func.func @transform_0(%arg0: i32) -> (i32, i32) {
    %c0_i32 = arith.constant 0 : i32
    %c0_i32_0 = arith.constant 0 : i32
    return %arg0, %c0_i32 : i32, i32
  }
  func.func @transform_1(%arg0: i32) -> (i32, i32) {
    %c0_i32 = arith.constant 0 : i32
    %c0_i32_0 = arith.constant 0 : i32
    return %arg0, %c0_i32 : i32, i32
  }
  func.func @transform_2(%arg0: i32) -> (i32, i32) {
    %c0_i32 = arith.constant 0 : i32
    %c0_i32_0 = arith.constant 0 : i32
    %c0_i32_1 = arith.constant 0 : i32
    return %c0_i32, %c0_i32_0 : i32, i32
  }
  func.func @transform_3(%arg0: i32) -> (i32, i32) {
    %c0_i32 = arith.constant 0 : i32
    %c0_i32_0 = arith.constant 0 : i32
    %c0_i32_1 = arith.constant 0 : i32
    return %c0_i32, %c0_i32_0 : i32, i32
  }
  func.func @transform_4(%arg0: i32) -> (i32, i32) {
    %c0_i32 = arith.constant 0 : i32
    %c0_i32_0 = arith.constant 0 : i32
    %c0_i32_1 = arith.constant 0 : i32
    return %c0_i32, %c0_i32_0 : i32, i32
  }
  func.func @transform_5(%arg0: i32) -> (i32, i32) {
    %c0_i32 = arith.constant 0 : i32
    %c0_i32_0 = arith.constant 0 : i32
    %c0_i32_1 = arith.constant 0 : i32
    return %c0_i32, %c0_i32_0 : i32, i32
  }
  func.func @transform_6(%arg0: i32) -> (i32, i32) {
    %c0_i32 = arith.constant 0 : i32
    %c0_i32_0 = arith.constant 0 : i32
    %c0_i32_1 = arith.constant 0 : i32
    return %c0_i32, %c0_i32_0 : i32, i32
  }
  func.func @transform_7(%arg0: i32) -> (i32, i32) {
    %c0_i32 = arith.constant 0 : i32
    %c0_i32_0 = arith.constant 0 : i32
    %c0_i32_1 = arith.constant 0 : i32
    return %c0_i32, %c0_i32_0 : i32, i32
  }
  func.func @transform_8(%arg0: i32) -> (i32, i32) {
    %c0_i32 = arith.constant 0 : i32
    %c0_i32_0 = arith.constant 0 : i32
    %c0_i32_1 = arith.constant 0 : i32
    return %c0_i32, %c0_i32_0 : i32, i32
  }
  func.func @transform_9(%arg0: i32) -> (i32, i32) {
    %c0_i32 = arith.constant 0 : i32
    %c0_i32_0 = arith.constant 0 : i32
    return %arg0, %c0_i32 : i32, i32
  }
}

</mosaic_0001>

<llo_original>
// kernel: tpu_custom_call.1
$region0: #{tpu_custom_call.1}
  #allocation0 [shape = 'u32[]', space=smem, size = 0x4, offset = 0x4, fixed_abs, tag = 'smem constant byte address 0x4 - core index']
  #allocation1 [shape = 'u32[144,128]{1,0:T(1,128)}', space=vmem, size = 0x12000, scoped, tag = 'internal scratch']
  #allocation2 [shape = 'f32[1,1]{1,0:T(1,128)S(1)}', space=vmem, size = 0x200, scoped, tag = 'scoped memory for tpu_custom_call.1']
  %s0 = inlined_call_operand.vmem [shape: f32[2,20], index: 0, kind: input, shape index: {}]
  %s1 = inlined_call_operand.vmem [shape: f32[2,5], index: 1, kind: input, shape index: {}]
  %s2 = inlined_call_operand.vmem [shape: f32[20,256], index: 2, kind: input, shape index: {}]
  %s3 = inlined_call_operand.vmem [shape: f32[5,256], index: 3, kind: input, shape index: {}]
  %s4 = inlined_call_operand.vmem [shape: f32[1,256], index: 4, kind: input, shape index: {}]
  %s5 = inlined_call_operand.vmem [shape: f32[256,32], index: 5, kind: input, shape index: {}]
  %s6 = inlined_call_operand.vmem [shape: f32[1,32], index: 6, kind: input, shape index: {}]
  %s7 = inlined_call_operand.vmem [shape: f32[1,32], index: 7, kind: input, shape index: {}]
  %s8 = inlined_call_operand.<no memory space> [shape: f32[1,1], index: 8, kind: input, shape index: {}]
  %s9 = inlined_call_operand.hbm [shape: f32[1,2], index: 9, kind: output, shape index: {}]
  %s10 = sld [smem:[#allocation0]]
  $region46: #{tpu_custom_call.1} parent=0
    _
  %s12 = ssub.s32 1, %s10
  %s13 = scalar_select 0, %s12, %s10
  %v14 = vstv %s8
  %15 = vst [vmem:[#allocation2] sm:$0x1] %v14
  $region1: #{tpu_custom_call.1} parent=0
    #allocation3 [shape = 'u8[512]{0}', space=vmem, size = 0x400, scoped, tag = 'output window, operand 0, single buffered']
    #allocation4 [shape = 's32[1]{0}', space=sflag, size = 0x4, scoped, tag = 'scoped memory for tpu_custom_call.1']
    %16 = vsyncpa [#allocation4], 0
    // Predicated region
    $region2: #{tpu_custom_call.1} parent=1 // pred_check
      _
    $region3: #{tpu_custom_call.1} parent=1 // pred_check_branch
      %18 = sbr.rel (0) target = $region5
    $region4: #{tpu_custom_call.1} parent=1 // pred_region
      _
    $region5: #{tpu_custom_call.1} parent=1 // pred_fallthru
      _
    // Predicated region
    $region6: #{tpu_custom_call.1} parent=1 // pred_check
      _
    $region7: #{tpu_custom_call.1} parent=1 // pred_check_branch
      %20 = sbr.rel (0) target = $region9
    $region8: #{tpu_custom_call.1} parent=1 // pred_region
      _
    $region9: #{tpu_custom_call.1} parent=1 // pred_fallthru
      _
    // Predicated region
    $region10: #{tpu_custom_call.1} parent=1 // pred_check
      _
    $region11: #{tpu_custom_call.1} parent=1 // pred_check_branch
      %22 = sbr.rel (0) target = $region13
    $region12: #{tpu_custom_call.1} parent=1 // pred_region
      _
    $region13: #{tpu_custom_call.1} parent=1 // pred_fallthru
      _
    // Predicated region
    $region14: #{tpu_custom_call.1} parent=1 // pred_check
      _
    $region15: #{tpu_custom_call.1} parent=1 // pred_check_branch
      %24 = sbr.rel (0) target = $region17
    $region16: #{tpu_custom_call.1} parent=1 // pred_region
      _
    $region17: #{tpu_custom_call.1} parent=1 // pred_fallthru
      _
    // Predicated region
    $region18: #{tpu_custom_call.1} parent=1 // pred_check
      _
    $region19: #{tpu_custom_call.1} parent=1 // pred_check_branch
      %26 = sbr.rel (0) target = $region21
    $region20: #{tpu_custom_call.1} parent=1 // pred_region
      _
    $region21: #{tpu_custom_call.1} parent=1 // pred_fallthru
      _
    // Predicated region
    $region22: #{tpu_custom_call.1} parent=1 // pred_check
      _
    $region23: #{tpu_custom_call.1} parent=1 // pred_check_branch
      %28 = sbr.rel (0) target = $region25
    $region24: #{tpu_custom_call.1} parent=1 // pred_region
      _
    $region25: #{tpu_custom_call.1} parent=1 // pred_fallthru
      _
    // Predicated region
    $region26: #{tpu_custom_call.1} parent=1 // pred_check
      _
    $region27: #{tpu_custom_call.1} parent=1 // pred_check_branch
      %30 = sbr.rel (0) target = $region29
    $region28: #{tpu_custom_call.1} parent=1 // pred_region
      _
    $region29: #{tpu_custom_call.1} parent=1 // pred_fallthru
      _
    // Predicated region
    $region30: #{tpu_custom_call.1} parent=1 // pred_check
      _
    $region31: #{tpu_custom_call.1} parent=1 // pred_check_branch
      %32 = sbr.rel (0) target = $region33
    $region32: #{tpu_custom_call.1} parent=1 // pred_region
      _
    $region33: #{tpu_custom_call.1} parent=1 // pred_fallthru
      _
    // Predicated region
    $region34: #{tpu_custom_call.1} parent=1 // pred_check
      _
    $region35: #{tpu_custom_call.1} parent=1 // pred_check_branch
      %34 = sbr.rel (0) target = $region37
    $region36: #{tpu_custom_call.1} parent=1 // pred_region
      _
    $region37: #{tpu_custom_call.1} parent=1 // pred_fallthru
      _
    %v35 = vld [vmem:[%s0] sm:$0x3]
    %v36 = vld [vmem:[%s2] sm:$0xff]
    %v37 = vld [vmem:[%s2 + $0x8] sm:$0xff]
    %v38 = vld [vmem:[%s2 + $0x10] sm:$0xff]
    %v39 = vld [vmem:[%s2 + $0x18] sm:$0xff]
    %v40 = vld [vmem:[%s2 + $0x20] sm:$0xf]
    %v41 = vld [vmem:[%s2 + $0x28] sm:$0xf]
    %v42 = vld [vmem:[%s1] sm:$0x3]
    %v43 = vld [vmem:[%s3] sm:$0x1f]
    %v44 = vld [vmem:[%s3 + $0x8] sm:$0x1f]
    %vm45 = vcmask 39936
    %v47 = vsel %vm45, %v42, 0
    %vm49 = vcmask 1044480
    %v51 = vsel %vm49, %v43, 0
    %v54 = vsel %vm49, %v44, 0
    %56 = vmatprep.subr.mxu0 0.0
    %57 = vmatpush1.msra.mxu0 0.0
    %58 = vmatprep.subr.mxu0 0.0
    %59 = vmatpush1.msra.mxu0 0.0
    %60 = vmatprep.subr.mxu0 0.0
    %61 = vmatpush1.msra.mxu0 0.0
    %62 = vmatprep.subr.mxu0 0.0
    %63 = vmatpush1.msra.mxu0 0.0
    %64 = vmatprep.subr.mxu0 0.0
    %65 = vmatpush1.msra.mxu0 0.0
    %66 = vmatprep.subr.mxu0 0.0
    %67 = vmatpush1.msra.mxu0 0.0
    %68 = vmatprep.subr.mxu0 0.0
    %69 = vmatpush1.msra.mxu0 0.0
    %70 = vmatprep.subr.mxu0 0.0
    %71 = vmatpush1.msra.mxu0 0.0
    %72 = vmatprep.subr.mxu0 0.0
    %73 = vmatpush1.msra.mxu0 0.0
    %74 = vmatprep.subr.mxu0 0.0
    %75 = vmatpush1.msra.mxu0 0.0
    %76 = vmatprep.subr.mxu0 0.0
    %77 = vmatpush1.msra.mxu0 0.0
    %78 = vmatprep.subr.mxu0 0.0
    %79 = vmatpush1.msra.mxu0 0.0
    %80 = vmatprep.subr.mxu0 0.0
    %81 = vmatpush1.msra.mxu0 0.0
    %82 = vmatprep.subr.mxu0 0.0
    %83 = vmatpush1.msra.mxu0 0.0
    %84 = vmatprep.subr.mxu0 0.0
    %85 = vmatpush1.msra.mxu0 0.0
    %86 = vmatprep.subr.mxu0 %v54
    %87 = vmatpush1.msra.mxu0 %v51
    %88 = vmatprep.subr.mxu0 0.0
    %89 = vmatpush2.msra.mxu0 0.0
    %90 = vmatprep.subr.mxu0 0.0
    %91 = vmatpush2.msra.mxu0 0.0
    %92 = vmatprep.subr.mxu0 0.0
    %93 = vmatpush2.msra.mxu0 0.0
    %94 = vmatprep.subr.mxu0 0.0
    %95 = vmatpush2.msra.mxu0 0.0
    %96 = vmatprep.subr.mxu0 0.0
    %97 = vmatpush2.msra.mxu0 0.0
    %98 = vmatprep.subr.mxu0 0.0
    %99 = vmatpush2.msra.mxu0 0.0
    %100 = vmatprep.subr.mxu0 0.0
    %101 = vmatpush2.msra.mxu0 0.0
    %102 = vmatprep.subr.mxu0 0.0
    %103 = vmatpush2.msra.mxu0 0.0
    %104 = vmatprep.subr.mxu0 0.0
    %105 = vmatpush2.msra.mxu0 0.0
    %106 = vmatprep.subr.mxu0 0.0
    %107 = vmatpush2.msra.mxu0 0.0
    %108 = vmatprep.subr.mxu0 0.0
    %109 = vmatpush2.msra.mxu0 0.0
    %110 = vmatprep.subr.mxu0 0.0
    %111 = vmatpush2.msra.mxu0 0.0
    %112 = vmatprep.subr.mxu0 0.0
    %113 = vmatpush2.msra.mxu0 0.0
    %114 = vmatprep.subr.mxu0 0.0
    %115 = vmatpush2.msra.mxu0 0.0
    %116 = vmatprep.subr.mxu0 0.0
    %117 = vmatpush2.msra.mxu0 0.0
    %118 = vmatprep.subr.mxu0 0.0
    %119 = vmatpush2.msra.mxu0 0.0
    %120 = vmatprep.mubr.f32.mxu0 0.0
    %121 = vmatmul.mubr.f32.gmra.mxu0 %v47
    %v122 = vpop.f32.mrf.mxu0
    %v123 = vadd.f32 0.0, %v122
    %v124 = vpop.f32.mrf.mxu0
    %v125 = vadd.f32 0.0, %v124
    %126 = vdwg.mxu0
    %vm127 = vcmask 162816
    %v129 = vsel %vm127, %v35, 0
    %vm131 = vcmask 1043456
    %v133 = vsel %vm131, %v40, 0
    %v136 = vsel %vm131, %v41, 0
    %138 = vmatprep.subr.mxu0 0.0
    %139 = vmatpush1.msra.mxu0 0.0
    %140 = vmatprep.subr.mxu0 0.0
    %141 = vmatpush1.msra.mxu0 0.0
    %142 = vmatprep.subr.mxu0 0.0
    %143 = vmatpush1.msra.mxu0 0.0
    %144 = vmatprep.subr.mxu0 0.0
    %145 = vmatpush1.msra.mxu0 0.0
    %146 = vmatprep.subr.mxu0 0.0
    %147 = vmatpush1.msra.mxu0 0.0
    %148 = vmatprep.subr.mxu0 0.0
    %149 = vmatpush1.msra.mxu0 0.0
    %150 = vmatprep.subr.mxu0 0.0
    %151 = vmatpush1.msra.mxu0 0.0
    %152 = vmatprep.subr.mxu0 0.0
    %153 = vmatpush1.msra.mxu0 0.0
    %154 = vmatprep.subr.mxu0 0.0
    %155 = vmatpush1.msra.mxu0 0.0
    %156 = vmatprep.subr.mxu0 0.0
    %157 = vmatpush1.msra.mxu0 0.0
    %158 = vmatprep.subr.mxu0 0.0
    %159 = vmatpush1.msra.mxu0 0.0
    %160 = vmatprep.subr.mxu0 0.0
    %161 = vmatpush1.msra.mxu0 0.0
    %162 = vmatprep.subr.mxu0 0.0
    %163 = vmatpush1.msra.mxu0 0.0
    %164 = vmatprep.subr.mxu0 %v136
    %165 = vmatpush1.msra.mxu0 %v133
    %166 = vmatprep.subr.mxu0 %v39
    %167 = vmatpush1.msra.mxu0 %v38
    %168 = vmatprep.subr.mxu0 %v37
    %169 = vmatpush1.msra.mxu0 %v36
    %170 = vmatprep.subr.mxu0 0.0
    %171 = vmatpush2.msra.mxu0 0.0
    %172 = vmatprep.subr.mxu0 0.0
    %173 = vmatpush2.msra.mxu0 0.0
    %174 = vmatprep.subr.mxu0 0.0
    %175 = vmatpush2.msra.mxu0 0.0
    %176 = vmatprep.subr.mxu0 0.0
    %177 = vmatpush2.msra.mxu0 0.0
    %178 = vmatprep.subr.mxu0 0.0
    %179 = vmatpush2.msra.mxu0 0.0
    %180 = vmatprep.subr.mxu0 0.0
    %181 = vmatpush2.msra.mxu0 0.0
    %182 = vmatprep.subr.mxu0 0.0
    %183 = vmatpush2.msra.mxu0 0.0
    %184 = vmatprep.subr.mxu0 0.0
    %185 = vmatpush2.msra.mxu0 0.0
    %186 = vmatprep.subr.mxu0 0.0
    %187 = vmatpush2.msra.mxu0 0.0
    %188 = vmatprep.subr.mxu0 0.0
    %189 = vmatpush2.msra.mxu0 0.0
    %190 = vmatprep.subr.mxu0 0.0
    %191 = vmatpush2.msra.mxu0 0.0
    %192 = vmatprep.subr.mxu0 0.0
    %193 = vmatpush2.msra.mxu0 0.0
    %194 = vmatprep.subr.mxu0 0.0
    %195 = vmatpush2.msra.mxu0 0.0
    %196 = vmatprep.subr.mxu0 0.0
    %197 = vmatpush2.msra.mxu0 0.0
    %198 = vmatprep.subr.mxu0 0.0
    %199 = vmatpush2.msra.mxu0 0.0
    %200 = vmatprep.subr.mxu0 0.0
    %201 = vmatpush2.msra.mxu0 0.0
    %202 = vmatprep.mubr.f32.mxu0 0.0
    %203 = vmatmul.mubr.f32.gmra.mxu0 %v129
    %v204 = vpop.f32.mrf.mxu0
    %v205 = vadd.f32 %v123, %v204
    %v206 = vpop.f32.mrf.mxu0
    %v207 = vadd.f32 %v125, %v206
    %208 = vdwg.mxu0
    %v209 = vld [vmem:[%s4] sm:$0x3]
    %v211 = vlaneseq
    %v212 = vshrl.u32 %v211, 7
    %v213 = vsub.s32 0, %v212
    %v214 = vrot.slane %v209, %v213
    %v215 = vlaneseq
    %v216 = vshrl.u32 %v215, 7
    %v217 = vsub.s32 1, %v216
    %v218 = vrot.slane %v209, %v217
    %v221 = vadd.f32 %v205, %v214
    %v222 = vadd.f32 %v207, %v218
    %v223 = vmax.f32 %v221, 0.0
    %v224 = vmax.f32 %v222, 0.0
    %v225 = vld [vmem:[%s5] sm:$0xff]
    %v226 = vld [vmem:[%s5 + $0x8] sm:$0xff]
    %v227 = vld [vmem:[%s5 + $0x10] sm:$0xff]
    %v228 = vld [vmem:[%s5 + $0x18] sm:$0xff]
    %v229 = vld [vmem:[%s5 + $0x20] sm:$0xff]
    %v230 = vld [vmem:[%s5 + $0x28] sm:$0xff]
    %v231 = vld [vmem:[%s5 + $0x30] sm:$0xff]
    %v232 = vld [vmem:[%s5 + $0x38] sm:$0xff]
    %v233 = vld [vmem:[%s5 + $0x40] sm:$0xff]
    %v234 = vld [vmem:[%s5 + $0x48] sm:$0xff]
    %v235 = vld [vmem:[%s5 + $0x50] sm:$0xff]
    %v236 = vld [vmem:[%s5 + $0x58] sm:$0xff]
    %v237 = vld [vmem:[%s5 + $0x60] sm:$0xff]
    %v238 = vld [vmem:[%s5 + $0x68] sm:$0xff]
    %v239 = vld [vmem:[%s5 + $0x70] sm:$0xff]
    %v240 = vld [vmem:[%s5 + $0x78] sm:$0xff]
    %v241 = vld [vmem:[%s5 + $0x80] sm:$0xff]
    %v242 = vld [vmem:[%s5 + $0x88] sm:$0xff]
    %v243 = vld [vmem:[%s5 + $0x90] sm:$0xff]
    %v244 = vld [vmem:[%s5 + $0x98] sm:$0xff]
    %v245 = vld [vmem:[%s5 + $0xa0] sm:$0xff]
    %v246 = vld [vmem:[%s5 + $0xa8] sm:$0xff]
    %v247 = vld [vmem:[%s5 + $0xb0] sm:$0xff]
    %v248 = vld [vmem:[%s5 + $0xb8] sm:$0xff]
    %v249 = vld [vmem:[%s5 + $0xc0] sm:$0xff]
    %v250 = vld [vmem:[%s5 + $0xc8] sm:$0xff]
    %v251 = vld [vmem:[%s5 + $0xd0] sm:$0xff]
    %v252 = vld [vmem:[%s5 + $0xd8] sm:$0xff]
    %v253 = vld [vmem:[%s5 + $0xe0] sm:$0xff]
    %v254 = vld [vmem:[%s5 + $0xe8] sm:$0xff]
    %v255 = vld [vmem:[%s5 + $0xf0] sm:$0xff]
    %v256 = vld [vmem:[%s5 + $0xf8] sm:$0xff]
    %v257 = vld [vmem:[%s6] sm:$0x1]
    %v259 = vlaneseq
    %v260 = vshrl.u32 %v259, 7
    %v261 = vsub.s32 0, %v260
    %v262 = vrot.slane %v257, %v261
    %264 = vmatprep.subr.mxu0 0.0
    %265 = vmatpush1.msra.mxu0 %v240
    %266 = vmatprep.subr.mxu0 0.0
    %267 = vmatpush1.msra.mxu0 %v239
    %268 = vmatprep.subr.mxu0 0.0
    %269 = vmatpush1.msra.mxu0 %v238
    %270 = vmatprep.subr.mxu0 0.0
    %271 = vmatpush1.msra.mxu0 %v237
    %272 = vmatprep.subr.mxu0 0.0
    %273 = vmatpush1.msra.mxu0 %v236
    %274 = vmatprep.subr.mxu0 0.0
    %275 = vmatpush1.msra.mxu0 %v235
    %276 = vmatprep.subr.mxu0 0.0
    %277 = vmatpush1.msra.mxu0 %v234
    %278 = vmatprep.subr.mxu0 0.0
    %279 = vmatpush1.msra.mxu0 %v233
    %280 = vmatprep.subr.mxu0 0.0
    %281 = vmatpush1.msra.mxu0 %v232
    %282 = vmatprep.subr.mxu0 0.0
    %283 = vmatpush1.msra.mxu0 %v231
    %284 = vmatprep.subr.mxu0 0.0
    %285 = vmatpush1.msra.mxu0 %v230
    %286 = vmatprep.subr.mxu0 0.0
    %287 = vmatpush1.msra.mxu0 %v229
    %288 = vmatprep.subr.mxu0 0.0
    %289 = vmatpush1.msra.mxu0 %v228
    %290 = vmatprep.subr.mxu0 0.0
    %291 = vmatpush1.msra.mxu0 %v227
    %292 = vmatprep.subr.mxu0 0.0
    %293 = vmatpush1.msra.mxu0 %v226
    %294 = vmatprep.subr.mxu0 0.0
    %295 = vmatpush1.msra.mxu0 %v225
    %296 = vmatprep.subr.mxu0 0.0
    %297 = vmatpush2.msra.mxu0 %v256
    %298 = vmatprep.subr.mxu0 0.0
    %299 = vmatpush2.msra.mxu0 %v255
    %300 = vmatprep.subr.mxu0 0.0
    %301 = vmatpush2.msra.mxu0 %v254
    %302 = vmatprep.subr.mxu0 0.0
    %303 = vmatpush2.msra.mxu0 %v253
    %304 = vmatprep.subr.mxu0 0.0
    %305 = vmatpush2.msra.mxu0 %v252
    %306 = vmatprep.subr.mxu0 0.0
    %307 = vmatpush2.msra.mxu0 %v251
    %308 = vmatprep.subr.mxu0 0.0
    %309 = vmatpush2.msra.mxu0 %v250
    %310 = vmatprep.subr.mxu0 0.0
    %311 = vmatpush2.msra.mxu0 %v249
    %312 = vmatprep.subr.mxu0 0.0
    %313 = vmatpush2.msra.mxu0 %v248
    %314 = vmatprep.subr.mxu0 0.0
    %315 = vmatpush2.msra.mxu0 %v247
    %316 = vmatprep.subr.mxu0 0.0
    %317 = vmatpush2.msra.mxu0 %v246
    %318 = vmatprep.subr.mxu0 0.0
    %319 = vmatpush2.msra.mxu0 %v245
    %320 = vmatprep.subr.mxu0 0.0
    %321 = vmatpush2.msra.mxu0 %v244
    %322 = vmatprep.subr.mxu0 0.0
    %323 = vmatpush2.msra.mxu0 %v243
    %324 = vmatprep.subr.mxu0 0.0
    %325 = vmatpush2.msra.mxu0 %v242
    %326 = vmatprep.subr.mxu0 0.0
    %327 = vmatpush2.msra.mxu0 %v241
    %328 = vmatprep.mubr.f32.mxu0 %v224
    %329 = vmatmul.mubr.f32.gmra.mxu0 %v223
    %v330 = vpop.f32.mrf.mxu0
    %v331 = vadd.f32 %v262, %v330
    %v332 = vpop.f32.mrf.mxu0
    %333 = vdwg.mxu0
    %v334 = vmax.f32 %v331, 0.0
    %v335 = vld [vmem:[%s7] sm:$0x1]
    %v336 = vld [vmem:[#allocation2] sm:$0x1]
    %338 = vset.pattern.permute.xlu0 0
    %339 = vperm.xlu0 %338, %v336
    %v340 = vpop.permute.xlu0 %339
    %v342 = vlaneseq
    %v343 = vshrl.u32 %v342, 7
    %v344 = vsub.s32 0, %v343
    %v345 = vrot.slane %v340, %v344
    %vm346 = vcmask 261120
    %v348 = vsel %vm346, %v335, 0
    %v351 = vsel %vm346, %v334, 0
    %353 = vmatprep.subr.mxu0 0.0
    %354 = vmatpush1.xpose.msra.mxu0 0.0
    %355 = vmatprep.subr.mxu0 0.0
    %356 = vmatpush1.xpose.msra.mxu0 0.0
    %357 = vmatprep.subr.mxu0 0.0
    %358 = vmatpush1.xpose.msra.mxu0 0.0
    %359 = vmatprep.subr.mxu0 0.0
    %360 = vmatpush1.xpose.msra.mxu0 0.0
    %361 = vmatprep.subr.mxu0 0.0
    %362 = vmatpush1.xpose.msra.mxu0 0.0
    %363 = vmatprep.subr.mxu0 0.0
    %364 = vmatpush1.xpose.msra.mxu0 0.0
    %365 = vmatprep.subr.mxu0 0.0
    %366 = vmatpush1.xpose.msra.mxu0 0.0
    %367 = vmatprep.subr.mxu0 0.0
    %368 = vmatpush1.xpose.msra.mxu0 0.0
    %369 = vmatprep.subr.mxu0 0.0
    %370 = vmatpush1.xpose.msra.mxu0 0.0
    %371 = vmatprep.subr.mxu0 0.0
    %372 = vmatpush1.xpose.msra.mxu0 0.0
    %373 = vmatprep.subr.mxu0 0.0
    %374 = vmatpush1.xpose.msra.mxu0 0.0
    %375 = vmatprep.subr.mxu0 0.0
    %376 = vmatpush1.xpose.msra.mxu0 0.0
    %377 = vmatprep.subr.mxu0 0.0
    %378 = vmatpush1.xpose.msra.mxu0 0.0
    %379 = vmatprep.subr.mxu0 0.0
    %380 = vmatpush1.xpose.msra.mxu0 0.0
    %381 = vmatprep.subr.mxu0 0.0
    %382 = vmatpush1.xpose.msra.mxu0 0.0
    %383 = vmatprep.subr.mxu0 0.0
    %384 = vmatpush1.xpose.msra.mxu0 %v351
    %385 = vmatprep.subr.mxu0 0.0
    %386 = vmatpush2.xpose.msra.mxu0 0.0
    %387 = vmatprep.subr.mxu0 0.0
    %388 = vmatpush2.xpose.msra.mxu0 0.0
    %389 = vmatprep.subr.mxu0 0.0
    %390 = vmatpush2.xpose.msra.mxu0 0.0
    %391 = vmatprep.subr.mxu0 0.0
    %392 = vmatpush2.xpose.msra.mxu0 0.0
    %393 = vmatprep.subr.mxu0 0.0
    %394 = vmatpush2.xpose.msra.mxu0 0.0
    %395 = vmatprep.subr.mxu0 0.0
    %396 = vmatpush2.xpose.msra.mxu0 0.0
    %397 = vmatprep.subr.mxu0 0.0
    %398 = vmatpush2.xpose.msra.mxu0 0.0
    %399 = vmatprep.subr.mxu0 0.0
    %400 = vmatpush2.xpose.msra.mxu0 0.0
    %401 = vmatprep.subr.mxu0 0.0
    %402 = vmatpush2.xpose.msra.mxu0 0.0
    %403 = vmatprep.subr.mxu0 0.0
    %404 = vmatpush2.xpose.msra.mxu0 0.0
    %405 = vmatprep.subr.mxu0 0.0
    %406 = vmatpush2.xpose.msra.mxu0 0.0
    %407 = vmatprep.subr.mxu0 0.0
    %408 = vmatpush2.xpose.msra.mxu0 0.0
    %409 = vmatprep.subr.mxu0 0.0
    %410 = vmatpush2.xpose.msra.mxu0 0.0
    %411 = vmatprep.subr.mxu0 0.0
    %412 = vmatpush2.xpose.msra.mxu0 0.0
    %413 = vmatprep.subr.mxu0 0.0
    %414 = vmatpush2.xpose.msra.mxu0 0.0
    %415 = vmatprep.subr.mxu0 0.0
    %416 = vmatpush2.xpose.msra.mxu0 0.0
    %417 = vmatprep.mubr.f32.mxu0 0.0
    %418 = vmatmul.mubr.f32.gmra.mxu0 %v348
    %v419 = vpop.f32.mrf.mxu0
    %v420 = vadd.f32 %v345, %v419
    %v421 = vpop.f32.mrf.mxu0
    %422 = vdwg.mxu0
    %vm423 = vcmask 8192
    %424 = vst.msk [vmem:[#allocation3] sm:$0x1] %vm423, %v420
    // Predicated region
    $region38: #{tpu_custom_call.1} parent=1 // pred_check
      _
    $region39: #{tpu_custom_call.1} parent=1 // pred_check_branch
      %426 = sbr.rel (0) target = $region41
    $region40: #{tpu_custom_call.1} parent=1 // pred_region
      %s428 = ssub.s32 16, 16
      %429 = vsyncadd [#allocation4], %s428
      %s431 = sshll.u32 [#allocation3], 4
      %s432 = int_to_ptr.vmem [resolvable:$true] %s431
      %434 = dma.vmem_to_hbm [thread:$0]  %s432, 16, %s9, [#allocation4]
    $region41: #{tpu_custom_call.1} parent=1 // pred_fallthru
      _
    // Predicated region
    $region42: #{tpu_custom_call.1} parent=1 // pred_check
      _
    $region43: #{tpu_custom_call.1} parent=1 // pred_check_branch
      %436 = sbr.rel (0) target = $region45
    $region44: #{tpu_custom_call.1} parent=1 // pred_region
      %437 = dma.done [#allocation4], 16
    $region45: #{tpu_custom_call.1} parent=1 // pred_fallthru
      _
    %438 = vsyncpa [#allocation4], 1

</llo_original>
